<compile_context>
chip_gen: v6e
topology: v6e:2x2x1
jax: 0.10.0
libtpu: 0.0.40
codegen_flags: <defaults>
</compile_context>

<pallas_src>
import functools
import math
from typing import NamedTuple

import jax
import jax.numpy as jnp
from jax.experimental import pallas as pl
from jax.experimental.pallas import tpu as pltpu


def _round_up(v, m):
    return ((v + m - 1) // m) * m


class PreparedAdj(NamedTuple):
    adj_p: jax.Array    # [n_pad, n_pad] adjacency (no self loops), MXU streaming dtype
    dinv_p: jax.Array   # [n_pad, 1] f32, D^{-1/2} (self loop incl.), zero in padding
    dinv: jax.Array     # [n] f32, unpadded (for per-layer feature scaling)
    n: int
    n_pad: int
    tm: int
    tk: int


def prepare_adjacency(adj, *, adj_dtype=jnp.bfloat16):
    """One-time O(N^2) setup shared by every GCNII layer.

    Pads the adjacency to a tile-friendly shape and casts it to the MXU streaming
    dtype (bf16 by default -- exact for 0/1 adjacencies, halves the dominant HBM
    stream).  Also precomputes D^{-1/2} with the self loop folded in.
    """
    n = adj.shape[0]
    deg = jnp.sum(adj.astype(jnp.float32), axis=1) + 1.0          # self loop included
    dinv = (1.0 / jnp.sqrt(deg)).astype(jnp.float32)

    # Tile sizes: keep them big; round N up to the tile rather than shrinking tiles.
    if n <= 512:
        n_pad = _round_up(n, 128)
        tk = n_pad
        tm = n_pad if n_pad <= 256 else (256 if n_pad % 256 == 0 else 128)
    else:
        tk = 512
        tm = 256
        n_pad = _round_up(n, 512)

    adj_p = jnp.pad(adj, ((0, n_pad - n), (0, n_pad - n))).astype(adj_dtype)
    dinv_p = jnp.pad(dinv[:, None], ((0, n_pad - n), (0, 0)))
    return PreparedAdj(adj_p, dinv_p, dinv, n, n_pad, tm, tk)


def _gcn2_kernel(*refs, theta, tk, xs_resident, residual):
    """One (row-tile i, adjacency-column-tile k) grid step.

    adj_ref : [tm, tk]              raw adjacency tile (no self loops, unnormalized)
    xs_ref  : [tk, C] or [N, C]     (1-alpha) * dinv * x   (contraction operand)
    bias_ref: [tm, C] f32           (1-alpha)*dinv^2*x + alpha*h0  (per-row bias)
    dinv_ref: [tm, 1] f32           D^{-1/2} rows
    w_ref   : [C, C_out] f32        theta * W
    xres_ref: [tm, C] (optional)    x rows for the residual add
    acc_ref : [tm, C] f32 scratch   accumulator for A @ xs, resident across k
    """
    if residual:
        adj_ref, xs_ref, bias_ref, dinv_ref, w_ref, xres_ref, out_ref, acc_ref = refs
    else:
        adj_ref, xs_ref, bias_ref, dinv_ref, w_ref, out_ref, acc_ref = refs
        xres_ref = None

    k = pl.program_id(1)

    @pl.when(k == 0)
    def _():
        acc_ref[...] = jnp.zeros_like(acc_ref)

    if xs_resident:
        start = pl.multiple_of(k * tk, tk)
        xs = xs_ref[pl.ds(start, tk), :]
    else:
        xs = xs_ref[...]

    a = adj_ref[...]
    mm_dt = jnp.promote_types(a.dtype, xs.dtype)
    # MXU: accumulate A @ ((1-alpha) * dinv * x) over adjacency-column tiles.
    acc_ref[...] += jnp.dot(a.astype(mm_dt), xs.astype(mm_dt),
                            preferred_element_type=jnp.float32)

    @pl.when(k == pl.num_programs(1) - 1)
    def _():
        dinv = dinv_ref[...]                                        # [tm, 1]
        # self loop + (1-alpha)/alpha mixing are already folded into xs / bias.
        support = dinv * acc_ref[...] + bias_ref[...]
        w = w_ref[...]                                              # theta * W
        out = jnp.dot(support.astype(w.dtype), w, preferred_element_type=jnp.float32)
        out = out + (1.0 - theta) * support
        if residual:  # static flag
            out = out + xres_ref[...].astype(jnp.float32)
        out_ref[...] = out.astype(out_ref.dtype)


def gcn_conv_ii(x, adj, h0, weight, *, lamda, alpha, l, residual=False,
                feature_dtype=jnp.float32, adj_dtype=jnp.bfloat16):
    """Pallas implementation of GCNConvII.forward (variant=False).

    `adj` may be a raw [N, N] adjacency (no self loops) or a PreparedAdj from
    prepare_adjacency(); prepare once and reuse it across all GCNII layers.
    """
    if not isinstance(adj, PreparedAdj):
        adj = prepare_adjacency(adj, adj_dtype=adj_dtype)
    p = adj

    theta = math.log(lamda / l + 1.0)
    n, c_in = x.shape
    c_out = weight.shape[1]
    assert n == p.n, "feature / adjacency node-count mismatch"
    # The (1-theta)*support add (and residual add) require matching channels,
    # exactly as in the PyTorch forward with variant=False.
    assert c_in == c_out, "GCNConvII (variant=False) needs in_channels == out_channels"

    c_in_pad = _round_up(c_in, 128)
    c_out_pad = _round_up(c_out, 128)
    n_pad, tm, tk = p.n_pad, p.tm, p.tk

    # ---- cheap per-layer precompute in XLA (O(N*C)) ----
    x32 = x.astype(jnp.float32)
    h032 = h0.astype(jnp.float32)
    dinv_col = p.dinv[:, None]
    xs = ((1.0 - alpha) * dinv_col) * x32                      # contraction operand
    bias = ((1.0 - alpha) * dinv_col * dinv_col) * x32 + alpha * h032

    def pad2(a, r, c):
        return jnp.pad(a, ((0, r - a.shape[0]), (0, c - a.shape[1])))

    xs_p = pad2(xs, n_pad, c_in_pad).astype(feature_dtype)
    bias_p = pad2(bias, n_pad, c_in_pad)
    w_p = pad2((theta * weight).astype(jnp.float32), c_in_pad, c_out_pad)

    # xs residency: keep the whole scaled feature matrix in VMEM when it fits
    # a conservative budget (safe on v7x's 64 MiB VMEM with double buffering).
    feat_bytes = jnp.dtype(feature_dtype).itemsize
    xs_resident = n_pad * c_in_pad * feat_bytes <= 8 * 1024 * 1024
    xs_spec = (pl.BlockSpec((n_pad, c_in_pad), lambda i, k: (0, 0)) if xs_resident
               else pl.BlockSpec((tk, c_in_pad), lambda i, k: (k, 0)))

    inputs = [p.adj_p, xs_p, bias_p, p.dinv_p, w_p]
    in_specs = [
        pl.BlockSpec((tm, tk), lambda i, k: (i, k)),                # adjacency tile
        xs_spec,                                                    # (1-a)*dinv*x
        pl.BlockSpec((tm, c_in_pad), lambda i, k: (i, 0)),          # bias rows
        pl.BlockSpec((tm, 1), lambda i, k: (i, 0)),                 # dinv rows
        pl.BlockSpec((c_in_pad, c_out_pad), lambda i, k: (0, 0)),   # theta * W
    ]
    if residual:
        inputs.append(pad2(x32, n_pad, c_in_pad))
        in_specs.append(pl.BlockSpec((tm, c_in_pad), lambda i, k: (i, 0)))

    grid = (n_pad // tm, n_pad // tk)

    kernel = functools.partial(_gcn2_kernel, theta=float(theta), tk=tk,
                               xs_resident=xs_resident, residual=bool(residual))

    adj_bytes = jnp.dtype(p.adj_p.dtype).itemsize
    out_bytes = jnp.dtype(x.dtype).itemsize
    flops = 2 * n_pad * n_pad * c_in_pad + 2 * n_pad * c_in_pad * c_out_pad
    bytes_accessed = int(n_pad * n_pad * adj_bytes
                         + n_pad * c_in_pad * (feat_bytes + 4)      # xs + bias
                         + n_pad * c_out_pad * out_bytes
                         + c_in_pad * c_out_pad * 4
                         + n_pad * 4)

    out_p = pl.pallas_call(
        kernel,
        out_shape=jax.ShapeDtypeStruct((n_pad, c_out_pad), x.dtype),
        grid_spec=pltpu.PrefetchScalarGridSpec(
            num_scalar_prefetch=0,
            grid=grid,
            in_specs=in_specs,
            out_specs=pl.BlockSpec((tm, c_out_pad), lambda i, k: (i, 0)),
            scratch_shapes=[pltpu.VMEM((tm, c_in_pad), jnp.float32)],
        ),
        compiler_params=pltpu.CompilerParams(
            dimension_semantics=("parallel", "arbitrary"),   # rows shard across TCs
            vmem_limit_bytes=48 * 1024 * 1024,                # safe on v5e/v6e/v7x
        ),
        cost_estimate=pl.CostEstimate(flops=flops, transcendentals=0,
                                      bytes_accessed=bytes_accessed),
    )(*inputs)

    return out_p[:n, :c_out]


def gcn_conv_ii_ref(x, adj, h0, weight, *, lamda, alpha, l, residual=False):
    """Pure-JAX reference mirroring the PyTorch forward (variant=False)."""
    n = adj.shape[0]
    a = adj + jnp.eye(n, dtype=adj.dtype)
    dinv = 1.0 / jnp.sqrt(jnp.sum(a, axis=1))
    a_norm = a * dinv[:, None] * dinv[None, :]
    theta = math.log(lamda / l + 1.0)
    hi = a_norm @ x
    support = (1.0 - alpha) * hi + alpha * h0
    out = theta * (support @ weight) + (1.0 - theta) * support
    if residual:
        out = out + x
    return out


if __name__ == "__main__":
    # Small, deterministic problem: N=16 nodes, 32 input features, 32 output features.
    N, C_IN, C_OUT = 16, 32, 32
    lamda, alpha = 0.5, 0.1

    key = jax.random.PRNGKey(0)
    kx, kh, ka, kw = jax.random.split(key, 4)

    x = jax.random.normal(kx, (N, C_IN), dtype=jnp.float32)
    h0 = jax.random.normal(kh, (N, C_IN), dtype=jnp.float32)

    # Random symmetric binary adjacency (undirected graph), zero diagonal.
    a_rand = (jax.random.uniform(ka, (N, N)) < 0.3).astype(jnp.float32)
    adj = jnp.maximum(a_rand, a_rand.T) * (1.0 - jnp.eye(N, dtype=jnp.float32))

    # Parameter init matching reset_parameters(): uniform(-stdv, stdv), stdv = 1/sqrt(out).
    stdv = 1.0 / math.sqrt(C_OUT)
    weight = jax.random.uniform(
        kw, (C_IN, C_OUT), dtype=jnp.float32, minval=-stdv, maxval=stdv
    )

    # Prepare the adjacency ONCE (pad + bf16 cast + D^{-1/2}); reuse across layers.
    prepared = prepare_adjacency(adj)

    # Layer 1 (residual=False) and layer 2 (residual=True), both reusing `prepared`.
    out1 = gcn_conv_ii(x, prepared, h0, weight, lamda=lamda, alpha=alpha, l=1,
                       residual=False)
    out2 = gcn_conv_ii(x, prepared, h0, weight, lamda=lamda, alpha=alpha, l=2,
                       residual=True)
    out1, out2 = jax.block_until_ready((out1, out2))

    ref1 = gcn_conv_ii_ref(x, adj, h0, weight, lamda=lamda, alpha=alpha, l=1,
                           residual=False)
    ref2 = gcn_conv_ii_ref(x, adj, h0, weight, lamda=lamda, alpha=alpha, l=2,
                           residual=True)

    assert out1.shape == (N, C_OUT) and out2.shape == (N, C_OUT)
    assert jnp.allclose(out1, ref1, atol=1e-4, rtol=1e-4), "mismatch (residual=False)"
    assert jnp.allclose(out2, ref2, atol=1e-4, rtol=1e-4), "mismatch (residual=True)"

    print("KERNEL_OK")
</pallas_src>

<mosaic_0001>
module attributes {stable_mosaic.version = 11 : i64} {
  func.func @_gcn2_kernel(%arg0: i32, %arg1: i32, %arg2: memref<128x128xbf16, #tpu.memory_space<vmem>>, %arg3: memref<128x128xf32, #tpu.memory_space<vmem>>, %arg4: memref<128x128xf32, #tpu.memory_space<vmem>>, %arg5: memref<128x1xf32, #tpu.memory_space<vmem>>, %arg6: memref<128x128xf32, #tpu.memory_space<vmem>>, %arg7: memref<128x128xf32, #tpu.memory_space<vmem>>, %arg8: memref<128x128xf32, #tpu.memory_space<vmem>>) attributes {dimension_semantics = [#tpu.dimension_semantics<parallel>, #tpu.dimension_semantics<arbitrary>], iteration_bounds = array<i64: 1, 1>, scalar_prefetch = 0 : i64, scratch_operands = 1 : i64, tpu.core_type = #tpu.core_type<tc>, window_params = [{transform_indices = @transform_0, window_bounds = array<i64: 128, 128>}, {pipeline_mode = #tpu.pipeline_mode<synchronous>, transform_indices = @transform_1, window_bounds = array<i64: 128, 128>}, {transform_indices = @transform_2, window_bounds = array<i64: 128, 128>}, {transform_indices = @transform_3, window_bounds = array<i64: 128, 1>}, {pipeline_mode = #tpu.pipeline_mode<synchronous>, transform_indices = @transform_4, window_bounds = array<i64: 128, 128>}, {transform_indices = @transform_5, window_bounds = array<i64: 128, 128>}]} {
    %c0_i32 = arith.constant 0 : i32
    %0 = arith.cmpi eq, %arg1, %c0_i32 : i32
    %1 = arith.extui %0 : i1 to i32
    %c0_i32_0 = arith.constant 0 : i32
    %2 = arith.cmpi ne, %1, %c0_i32_0 : i32
    scf.if %2 {
      %cst_9 = arith.constant 0.000000e+00 : f32
      %16 = vector.broadcast %cst_9 : f32 to vector<128x128xf32>
      %c0_10 = arith.constant 0 : index
      %c0_11 = arith.constant 0 : index
      %17 = vector.load %arg8[%c0_10, %c0_11] : memref<128x128xf32, #tpu.memory_space<vmem>>, vector<128x128xf32>
      tpu.vector_store %arg8[%c0_10, %c0_11], %16 {strides = array<i32>} : memref<128x128xf32, #tpu.memory_space<vmem>>, vector<128x128xf32>,
    } else {
    }
    %c128_i32 = arith.constant 128 : i32
    %3 = arith.muli %arg1, %c128_i32 : i32
    %4 = tpu.assume_multiple %3, 128 : i32
    %5 = arith.index_cast %4 : i32 to index
    %c0 = arith.constant 0 : index
    %6 = vector.load %arg3[%5, %c0] : memref<128x128xf32, #tpu.memory_space<vmem>>, vector<128x128xf32>
    %c0_1 = arith.constant 0 : index
    %c0_2 = arith.constant 0 : index
    %7 = vector.load %arg2[%c0_1, %c0_2] : memref<128x128xbf16, #tpu.memory_space<vmem>>, vector<128x128xbf16>
    %c0_3 = arith.constant 0 : index
    %c0_4 = arith.constant 0 : index
    %8 = vector.load %arg8[%c0_3, %c0_4] : memref<128x128xf32, #tpu.memory_space<vmem>>, vector<128x128xf32>
    %9 = arith.extf %7 : vector<128x128xbf16> to vector<128x128xf32>
    %cst = arith.constant dense<0.000000e+00> : vector<128x128xf32>
    %10 = tpu.matmul %9, %6, %cst {dimension_numbers = #tpu.dot_dimension_numbers<[1], [0], [0], [1], [0, 0, 1, 1], [], []>} : vector<128x128xf32>, vector<128x128xf32>, vector<128x128xf32> -> vector<128x128xf32>
    %11 = arith.addf %8, %10 : vector<128x128xf32>
    %c0_5 = arith.constant 0 : index
    %c0_6 = arith.constant 0 : index
    %12 = vector.load %arg8[%c0_5, %c0_6] : memref<128x128xf32, #tpu.memory_space<vmem>>, vector<128x128xf32>
    tpu.vector_store %arg8[%c0_5, %c0_6], %11 {strides = array<i32>} : memref<128x128xf32, #tpu.memory_space<vmem>>, vector<128x128xf32>,
    %c0_i32_7 = arith.constant 0 : i32
    %13 = arith.cmpi eq, %arg1, %c0_i32_7 : i32
    %14 = arith.extui %13 : i1 to i32
    %c0_i32_8 = arith.constant 0 : i32
    %15 = arith.cmpi ne, %14, %c0_i32_8 : i32
    scf.if %15 {
      %c0_9 = arith.constant 0 : index
      %c0_10 = arith.constant 0 : index
      %16 = vector.load %arg5[%c0_9, %c0_10] : memref<128x1xf32, #tpu.memory_space<vmem>>, vector<128x1xf32>
      %c0_11 = arith.constant 0 : index
      %c0_12 = arith.constant 0 : index
      %17 = vector.load %arg8[%c0_11, %c0_12] : memref<128x128xf32, #tpu.memory_space<vmem>>, vector<128x128xf32>
      %18 = vector.broadcast %16 : vector<128x1xf32> to vector<128x128xf32>
      %19 = arith.mulf %18, %17 : vector<128x128xf32>
      %c0_13 = arith.constant 0 : index
      %c0_14 = arith.constant 0 : index
      %20 = vector.load %arg4[%c0_13, %c0_14] : memref<128x128xf32, #tpu.memory_space<vmem>>, vector<128x128xf32>
      %21 = arith.addf %19, %20 : vector<128x128xf32>
      %c0_15 = arith.constant 0 : index
      %c0_16 = arith.constant 0 : index
      %22 = vector.load %arg6[%c0_15, %c0_16] : memref<128x128xf32, #tpu.memory_space<vmem>>, vector<128x128xf32>
      %cst_17 = arith.constant dense<0.000000e+00> : vector<128x128xf32>
      %23 = tpu.matmul %21, %22, %cst_17 {dimension_numbers = #tpu.dot_dimension_numbers<[1], [0], [0], [1], [0, 0, 1, 1], [], []>} : vector<128x128xf32>, vector<128x128xf32>, vector<128x128xf32> -> vector<128x128xf32>
      %cst_18 = arith.constant 0.594534874 : f32
      %24 = vector.broadcast %cst_18 : f32 to vector<128x128xf32>
      %25 = arith.mulf %24, %21 : vector<128x128xf32>
      %26 = arith.addf %23, %25 : vector<128x128xf32>
      %c0_19 = arith.constant 0 : index
      %c0_20 = arith.constant 0 : index
      %27 = vector.load %arg7[%c0_19, %c0_20] : memref<128x128xf32, #tpu.memory_space<vmem>>, vector<128x128xf32>
      tpu.vector_store %arg7[%c0_19, %c0_20], %26 {strides = array<i32>} : memref<128x128xf32, #tpu.memory_space<vmem>>, vector<128x128xf32>,
    } else {
    }
    return
  }
  func.func @transform_0(%arg0: i32, %arg1: i32) -> (i32, i32) {
    %c0_i32 = arith.constant 0 : i32
    return %arg0, %arg1 : i32, i32
  }
  func.func @transform_1(%arg0: i32, %arg1: i32) -> (i32, i32) {
    %c0_i32 = arith.constant 0 : i32
    %c0_i32_0 = arith.constant 0 : i32
    %c0_i32_1 = arith.constant 0 : i32
    return %c0_i32, %c0_i32_0 : i32, i32
  }
  func.func @transform_2(%arg0: i32, %arg1: i32) -> (i32, i32) {
    %c0_i32 = arith.constant 0 : i32
    %c0_i32_0 = arith.constant 0 : i32
    return %arg0, %c0_i32 : i32, i32
  }
  func.func @transform_3(%arg0: i32, %arg1: i32) -> (i32, i32) {
    %c0_i32 = arith.constant 0 : i32
    %c0_i32_0 = arith.constant 0 : i32
    return %arg0, %c0_i32 : i32, i32
  }
  func.func @transform_4(%arg0: i32, %arg1: i32) -> (i32, i32) {
    %c0_i32 = arith.constant 0 : i32
    %c0_i32_0 = arith.constant 0 : i32
    %c0_i32_1 = arith.constant 0 : i32
    return %c0_i32, %c0_i32_0 : i32, i32
  }
  func.func @transform_5(%arg0: i32, %arg1: i32) -> (i32, i32) {
    %c0_i32 = arith.constant 0 : i32
    %c0_i32_0 = arith.constant 0 : i32
    return %arg0, %c0_i32 : i32, i32
  }
}

</mosaic_0001>

<llo_original>
// kernel: tpu_custom_call.1
$region0: #{tpu_custom_call.1}
  #allocation0 [shape = 'u32[]', space=smem, size = 0x4, offset = 0x4, fixed_abs, tag = 'smem constant byte address 0x4 - core index']
  #allocation1 [shape = 'u32[144,128]{1,0:T(1,128)}', space=vmem, size = 0x12000, scoped, tag = 'internal scratch']
  #allocation2 [shape = 'f32[128,128]{1,0:T(8,128)}', space=vmem, size = 0x10000, scoped, tag = 'scratch operand']
  %s0 = inlined_call_operand.hbm [shape: bf16[128,128], index: 0, kind: input, shape index: {}]
  %s1 = inlined_call_operand.vmem [shape: f32[128,128], index: 1, kind: input, shape index: {}]
  %s2 = inlined_call_operand.hbm [shape: f32[128,128], index: 2, kind: input, shape index: {}]
  %s3 = inlined_call_operand.vmem [shape: f32[128,1], index: 3, kind: input, shape index: {}]
  %s4 = inlined_call_operand.hbm [shape: f32[128,128], index: 4, kind: input, shape index: {}]
  %s5 = inlined_call_operand.hbm [shape: f32[128,128], index: 5, kind: output, shape index: {}]
  %s6 = sld [smem:[#allocation0]]
  $region50: #{tpu_custom_call.1} parent=0
    _
  %s8 = ssub.s32 1, %s6
  %s9 = scalar_select 0, %s8, %s6
  $region1: #{tpu_custom_call.1} parent=0
    #allocation3 [shape = 'u8[32768]{0}', space=vmem, size = 0x8000, scoped, tag = 'input window, operand 0, single buffered']
    #allocation4 [shape = 's32[1]{0}', space=sflag, size = 0x4, scoped, tag = 'scoped memory for tpu_custom_call.1']
    #allocation5 [shape = 's32[1]{0}', space=sflag, size = 0x4, scoped, tag = 'scoped memory for tpu_custom_call.1']
    #allocation6 [shape = 'u8[65536]{0}', space=vmem, size = 0x10000, scoped, tag = 'input window, operand 2, single buffered']
    #allocation7 [shape = 's32[1]{0}', space=sflag, size = 0x4, scoped, tag = 'scoped memory for tpu_custom_call.1']
    #allocation8 [shape = 'u8[65536]{0}', space=vmem, size = 0x10000, scoped, tag = 'input window, operand 4, single buffered']
    #allocation9 [shape = 'u8[65536]{0}', space=vmem, size = 0x10000, scoped, tag = 'output window, operand 0, single buffered']
    %10 = vsyncpa [#allocation4], 0
    %11 = vsyncpa [#allocation7], 0
    %12 = vsyncpa [#allocation5], 0
    // Predicated region
    $region2: #{tpu_custom_call.1} parent=1 // pred_check
      _
    $region3: #{tpu_custom_call.1} parent=1 // pred_check_branch
      %14 = sbr.rel (0) target = $region5
    $region4: #{tpu_custom_call.1} parent=1 // pred_region
      %s16 = ssub.s32 1024, 1024
      %17 = vsyncadd [#allocation4], %s16
      %s18 = sshll.u32 [#allocation3], 4
      %s19 = int_to_ptr.vmem [resolvable:$true] %s18
      %24 = dma.hbm_to_vmem [thread:$0]  %s0, 1024, %s19, [#allocation4], 64, 64, 4
    $region5: #{tpu_custom_call.1} parent=1 // pred_fallthru
      _
    // Predicated region
    $region6: #{tpu_custom_call.1} parent=1 // pred_check
      _
    $region7: #{tpu_custom_call.1} parent=1 // pred_check_branch
      %26 = sbr.rel (0) target = $region9
    $region8: #{tpu_custom_call.1} parent=1 // pred_region
      _
    $region9: #{tpu_custom_call.1} parent=1 // pred_fallthru
      _
    // Predicated region
    $region10: #{tpu_custom_call.1} parent=1 // pred_check
      _
    $region11: #{tpu_custom_call.1} parent=1 // pred_check_branch
      %28 = sbr.rel (0) target = $region13
    $region12: #{tpu_custom_call.1} parent=1 // pred_region
      %s30 = ssub.s32 2048, 2048
      %31 = vsyncadd [#allocation7], %s30
      %s32 = sshll.u32 [#allocation6], 4
      %s33 = int_to_ptr.vmem [resolvable:$true] %s32
      %38 = dma.hbm_to_vmem [thread:$0]  %s2, 2048, %s33, [#allocation7], 128, 128, 8
    $region13: #{tpu_custom_call.1} parent=1 // pred_fallthru
      _
    // Predicated region
    $region14: #{tpu_custom_call.1} parent=1 // pred_check
      _
    $region15: #{tpu_custom_call.1} parent=1 // pred_check_branch
      %40 = sbr.rel (0) target = $region17
    $region16: #{tpu_custom_call.1} parent=1 // pred_region
      _
    $region17: #{tpu_custom_call.1} parent=1 // pred_fallthru
      _
    // Predicated region
    $region18: #{tpu_custom_call.1} parent=1 // pred_check
      _
    $region19: #{tpu_custom_call.1} parent=1 // pred_check_branch
      %42 = sbr.rel (0) target = $region21
    $region20: #{tpu_custom_call.1} parent=1 // pred_region
      %s44 = ssub.s32 2048, 2048
      %45 = vsyncadd [#allocation7], %s44
      %s46 = sshll.u32 [#allocation8], 4
      %s47 = int_to_ptr.vmem [resolvable:$true] %s46
      %52 = dma.hbm_to_vmem [thread:$0]  %s4, 2048, %s47, [#allocation7], 128, 128, 8
    $region21: #{tpu_custom_call.1} parent=1 // pred_fallthru
      _
    // Predicated region
    $region22: #{tpu_custom_call.1} parent=1 // pred_check
      _
    $region23: #{tpu_custom_call.1} parent=1 // pred_check_branch
      %54 = sbr.rel (0) target = $region25
    $region24: #{tpu_custom_call.1} parent=1 // pred_region
      %55 = dma.done [#allocation4], 1024
    $region25: #{tpu_custom_call.1} parent=1 // pred_fallthru
      _
    // Predicated region
    $region26: #{tpu_custom_call.1} parent=1 // pred_check
      _
    $region27: #{tpu_custom_call.1} parent=1 // pred_check_branch
      %57 = sbr.rel (0) target = $region29
    $region28: #{tpu_custom_call.1} parent=1 // pred_region
      %58 = dma.done [#allocation7], 2048
    $region29: #{tpu_custom_call.1} parent=1 // pred_fallthru
      _
    // Predicated region
    $region30: #{tpu_custom_call.1} parent=1 // pred_check
      _
    $region31: #{tpu_custom_call.1} parent=1 // pred_check_branch
      %60 = sbr.rel (0) target = $region33
    $region32: #{tpu_custom_call.1} parent=1 // pred_region
      %61 = dma.done [#allocation7], 2048
    $region33: #{tpu_custom_call.1} parent=1 // pred_fallthru
      _
    %p62 = scmp.eq.s32.totalorder 0, 0
    // Predicated region
    $region34: #{tpu_custom_call.1} parent=1 // pred_check
      %p63 = pneg %p62
    $region35: #{tpu_custom_call.1} parent=1 // pred_check_branch
      %65 = sbr.rel (%p63) target = $region37
    $region36: #{tpu_custom_call.1} parent=1 // pred_region
      %66 = vst [vmem:[#allocation2] sm:$0xff] 0.0
      %67 = vst [vmem:[#allocation2 + $0x8] sm:$0xff] 0.0
      %68 = vst [vmem:[#allocation2 + $0x10] sm:$0xff] 0.0
      %69 = vst [vmem:[#allocation2 + $0x18] sm:$0xff] 0.0
      %70 = vst [vmem:[#allocation2 + $0x20] sm:$0xff] 0.0
      %71 = vst [vmem:[#allocation2 + $0x28] sm:$0xff] 0.0
      %72 = vst [vmem:[#allocation2 + $0x30] sm:$0xff] 0.0
      %73 = vst [vmem:[#allocation2 + $0x38] sm:$0xff] 0.0
      %74 = vst [vmem:[#allocation2 + $0x40] sm:$0xff] 0.0
      %75 = vst [vmem:[#allocation2 + $0x48] sm:$0xff] 0.0
      %76 = vst [vmem:[#allocation2 + $0x50] sm:$0xff] 0.0
      %77 = vst [vmem:[#allocation2 + $0x58] sm:$0xff] 0.0
      %78 = vst [vmem:[#allocation2 + $0x60] sm:$0xff] 0.0
      %79 = vst [vmem:[#allocation2 + $0x68] sm:$0xff] 0.0
      %80 = vst [vmem:[#allocation2 + $0x70] sm:$0xff] 0.0
      %81 = vst [vmem:[#allocation2 + $0x78] sm:$0xff] 0.0
    $region37: #{tpu_custom_call.1} parent=1 // pred_fallthru
      _
    %s82 = smul.u32 0, 128
    %s83 = scalar_lea.vmem %s1, %s82
    %v84 = vld [vmem:[%s83] sm:$0xff]
    %v85 = vld [vmem:[%s83 + $0x8] sm:$0xff]
    %v86 = vld [vmem:[%s83 + $0x10] sm:$0xff]
    %v87 = vld [vmem:[%s83 + $0x18] sm:$0xff]
    %v88 = vld [vmem:[%s83 + $0x20] sm:$0xff]
    %v89 = vld [vmem:[%s83 + $0x28] sm:$0xff]
    %v90 = vld [vmem:[%s83 + $0x30] sm:$0xff]
    %v91 = vld [vmem:[%s83 + $0x38] sm:$0xff]
    %v92 = vld [vmem:[%s83 + $0x40] sm:$0xff]
    %v93 = vld [vmem:[%s83 + $0x48] sm:$0xff]
    %v94 = vld [vmem:[%s83 + $0x50] sm:$0xff]
    %v95 = vld [vmem:[%s83 + $0x58] sm:$0xff]
    %v96 = vld [vmem:[%s83 + $0x60] sm:$0xff]
    %v97 = vld [vmem:[%s83 + $0x68] sm:$0xff]
    %v98 = vld [vmem:[%s83 + $0x70] sm:$0xff]
    %v99 = vld [vmem:[%s83 + $0x78] sm:$0xff]
    %v100 = vld [vmem:[#allocation3] sm:$0xf]
    %v101 = vld [vmem:[#allocation3 + $0x4] sm:$0xf]
    %v102 = vld [vmem:[#allocation3 + $0x8] sm:$0xf]
    %v103 = vld [vmem:[#allocation3 + $0xc] sm:$0xf]
    %v104 = vld [vmem:[#allocation3 + $0x10] sm:$0xf]
    %v105 = vld [vmem:[#allocation3 + $0x14] sm:$0xf]
    %v106 = vld [vmem:[#allocation3 + $0x18] sm:$0xf]
    %v107 = vld [vmem:[#allocation3 + $0x1c] sm:$0xf]
    %v108 = vld [vmem:[#allocation3 + $0x20] sm:$0xf]
    %v109 = vld [vmem:[#allocation3 + $0x24] sm:$0xf]
    %v110 = vld [vmem:[#allocation3 + $0x28] sm:$0xf]
    %v111 = vld [vmem:[#allocation3 + $0x2c] sm:$0xf]
    %v112 = vld [vmem:[#allocation3 + $0x30] sm:$0xf]
    %v113 = vld [vmem:[#allocation3 + $0x34] sm:$0xf]
    %v114 = vld [vmem:[#allocation3 + $0x38] sm:$0xf]
    %v115 = vld [vmem:[#allocation3 + $0x3c] sm:$0xf]
    %v116 = vld [vmem:[#allocation2] sm:$0xff]
    %v117 = vld [vmem:[#allocation2 + $0x8] sm:$0xff]
    %v118 = vld [vmem:[#allocation2 + $0x10] sm:$0xff]
    %v119 = vld [vmem:[#allocation2 + $0x18] sm:$0xff]
    %v120 = vld [vmem:[#allocation2 + $0x20] sm:$0xff]
    %v121 = vld [vmem:[#allocation2 + $0x28] sm:$0xff]
    %v122 = vld [vmem:[#allocation2 + $0x30] sm:$0xff]
    %v123 = vld [vmem:[#allocation2 + $0x38] sm:$0xff]
    %v124 = vld [vmem:[#allocation2 + $0x40] sm:$0xff]
    %v125 = vld [vmem:[#allocation2 + $0x48] sm:$0xff]
    %v126 = vld [vmem:[#allocation2 + $0x50] sm:$0xff]
    %v127 = vld [vmem:[#allocation2 + $0x58] sm:$0xff]
    %v128 = vld [vmem:[#allocation2 + $0x60] sm:$0xff]
    %v129 = vld [vmem:[#allocation2 + $0x68] sm:$0xff]
    %v130 = vld [vmem:[#allocation2 + $0x70] sm:$0xff]
    %v131 = vld [vmem:[#allocation2 + $0x78] sm:$0xff]
    %v132 = vunpack.c.l.bf16 %v100
    %v133 = vunpack.c.l.bf16 %v101
    %v134 = vunpack.c.l.bf16 %v102
    %v135 = vunpack.c.l.bf16 %v103
    %v136 = vunpack.c.l.bf16 %v104
    %v137 = vunpack.c.l.bf16 %v105
    %v138 = vunpack.c.l.bf16 %v106
    %v139 = vunpack.c.l.bf16 %v107
    %v140 = vunpack.c.l.bf16 %v108
    %v141 = vunpack.c.l.bf16 %v109
    %v142 = vunpack.c.l.bf16 %v110
    %v143 = vunpack.c.l.bf16 %v111
    %v144 = vunpack.c.l.bf16 %v112
    %v145 = vunpack.c.l.bf16 %v113
    %v146 = vunpack.c.l.bf16 %v114
    %v147 = vunpack.c.l.bf16 %v115
    %148 = vmatprep.subr.mxu0 0.0
    %149 = vmatpush1.msra.mxu0 %v99
    %150 = vmatprep.subr.mxu0 0.0
    %151 = vmatpush1.msra.mxu0 %v98
    %152 = vmatprep.subr.mxu0 0.0
    %153 = vmatpush1.msra.mxu0 %v97
    %154 = vmatprep.subr.mxu0 0.0
    %155 = vmatpush1.msra.mxu0 %v96
    %156 = vmatprep.subr.mxu0 0.0
    %157 = vmatpush1.msra.mxu0 %v95
    %158 = vmatprep.subr.mxu0 0.0
    %159 = vmatpush1.msra.mxu0 %v94
    %160 = vmatprep.subr.mxu0 0.0
    %161 = vmatpush1.msra.mxu0 %v93
    %162 = vmatprep.subr.mxu0 0.0
    %163 = vmatpush1.msra.mxu0 %v92
    %164 = vmatprep.subr.mxu0 0.0
    %165 = vmatpush1.msra.mxu0 %v91
    %166 = vmatprep.subr.mxu0 0.0
    %167 = vmatpush1.msra.mxu0 %v90
    %168 = vmatprep.subr.mxu0 0.0
    %169 = vmatpush1.msra.mxu0 %v89
    %170 = vmatprep.subr.mxu0 0.0
    %171 = vmatpush1.msra.mxu0 %v88
    %172 = vmatprep.subr.mxu0 0.0
    %173 = vmatpush1.msra.mxu0 %v87
    %174 = vmatprep.subr.mxu0 0.0
    %175 = vmatpush1.msra.mxu0 %v86
    %176 = vmatprep.subr.mxu0 0.0
    %177 = vmatpush1.msra.mxu0 %v85
    %178 = vmatprep.subr.mxu0 0.0
    %179 = vmatpush1.msra.mxu0 %v84
    %180 = vmatprep.subr.mxu0 0.0
    %181 = vmatpush2.msra.mxu0 0.0
    %182 = vmatprep.subr.mxu0 0.0
    %183 = vmatpush2.msra.mxu0 0.0
    %184 = vmatprep.subr.mxu0 0.0
    %185 = vmatpush2.msra.mxu0 0.0
    %186 = vmatprep.subr.mxu0 0.0
    %187 = vmatpush2.msra.mxu0 0.0
    %188 = vmatprep.subr.mxu0 0.0
    %189 = vmatpush2.msra.mxu0 0.0
    %190 = vmatprep.subr.mxu0 0.0
    %191 = vmatpush2.msra.mxu0 0.0
    %192 = vmatprep.subr.mxu0 0.0
    %193 = vmatpush2.msra.mxu0 0.0
    %194 = vmatprep.subr.mxu0 0.0
    %195 = vmatpush2.msra.mxu0 0.0
    %196 = vmatprep.subr.mxu0 0.0
    %197 = vmatpush2.msra.mxu0 0.0
    %198 = vmatprep.subr.mxu0 0.0
    %199 = vmatpush2.msra.mxu0 0.0
    %200 = vmatprep.subr.mxu0 0.0
    %201 = vmatpush2.msra.mxu0 0.0
    %202 = vmatprep.subr.mxu0 0.0
    %203 = vmatpush2.msra.mxu0 0.0
    %204 = vmatprep.subr.mxu0 0.0
    %205 = vmatpush2.msra.mxu0 0.0
    %206 = vmatprep.subr.mxu0 0.0
    %207 = vmatpush2.msra.mxu0 0.0
    %208 = vmatprep.subr.mxu0 0.0
    %209 = vmatpush2.msra.mxu0 0.0
    %210 = vmatprep.subr.mxu0 0.0
    %211 = vmatpush2.msra.mxu0 0.0
    %212 = vmatprep.mubr.f32.mxu0 0.0
    %213 = vmatmul.mubr.f32.gmra.mxu0 %v132
    %v214 = vpop.f32.mrf.mxu0
    %v215 = vadd.f32 0.0, %v214
    %v216 = vpop.f32.mrf.mxu0
    %217 = vmatprep.mubr.f32.mxu0 0.0
    %218 = vmatmul.mubr.f32.gmra.mxu0 %v133
    %v219 = vpop.f32.mrf.mxu0
    %v220 = vadd.f32 0.0, %v219
    %v221 = vpop.f32.mrf.mxu0
    %222 = vmatprep.mubr.f32.mxu0 0.0
    %223 = vmatmul.mubr.f32.gmra.mxu0 %v134
    %v224 = vpop.f32.mrf.mxu0
    %v225 = vadd.f32 0.0, %v224
    %v226 = vpop.f32.mrf.mxu0
    %227 = vmatprep.mubr.f32.mxu0 0.0
    %228 = vmatmul.mubr.f32.gmra.mxu0 %v135
    %v229 = vpop.f32.mrf.mxu0
    %v230 = vadd.f32 0.0, %v229
    %v231 = vpop.f32.mrf.mxu0
    %232 = vmatprep.mubr.f32.mxu0 0.0
    %233 = vmatmul.mubr.f32.gmra.mxu0 %v136
    %v234 = vpop.f32.mrf.mxu0
    %v235 = vadd.f32 0.0, %v234
    %v236 = vpop.f32.mrf.mxu0
    %237 = vmatprep.mubr.f32.mxu0 0.0
    %238 = vmatmul.mubr.f32.gmra.mxu0 %v137
    %v239 = vpop.f32.mrf.mxu0
    %v240 = vadd.f32 0.0, %v239
    %v241 = vpop.f32.mrf.mxu0
    %242 = vmatprep.mubr.f32.mxu0 0.0
    %243 = vmatmul.mubr.f32.gmra.mxu0 %v138
    %v244 = vpop.f32.mrf.mxu0
    %v245 = vadd.f32 0.0, %v244
    %v246 = vpop.f32.mrf.mxu0
    %247 = vmatprep.mubr.f32.mxu0 0.0
    %248 = vmatmul.mubr.f32.gmra.mxu0 %v139
    %v249 = vpop.f32.mrf.mxu0
    %v250 = vadd.f32 0.0, %v249
    %v251 = vpop.f32.mrf.mxu0
    %252 = vmatprep.mubr.f32.mxu0 0.0
    %253 = vmatmul.mubr.f32.gmra.mxu0 %v140
    %v254 = vpop.f32.mrf.mxu0
    %v255 = vadd.f32 0.0, %v254
    %v256 = vpop.f32.mrf.mxu0
    %257 = vmatprep.mubr.f32.mxu0 0.0
    %258 = vmatmul.mubr.f32.gmra.mxu0 %v141
    %v259 = vpop.f32.mrf.mxu0
    %v260 = vadd.f32 0.0, %v259
    %v261 = vpop.f32.mrf.mxu0
    %262 = vmatprep.mubr.f32.mxu0 0.0
    %263 = vmatmul.mubr.f32.gmra.mxu0 %v142
    %v264 = vpop.f32.mrf.mxu0
    %v265 = vadd.f32 0.0, %v264
    %v266 = vpop.f32.mrf.mxu0
    %267 = vmatprep.mubr.f32.mxu0 0.0
    %268 = vmatmul.mubr.f32.gmra.mxu0 %v143
    %v269 = vpop.f32.mrf.mxu0
    %v270 = vadd.f32 0.0, %v269
    %v271 = vpop.f32.mrf.mxu0
    %272 = vmatprep.mubr.f32.mxu0 0.0
    %273 = vmatmul.mubr.f32.gmra.mxu0 %v144
    %v274 = vpop.f32.mrf.mxu0
    %v275 = vadd.f32 0.0, %v274
    %v276 = vpop.f32.mrf.mxu0
    %277 = vmatprep.mubr.f32.mxu0 0.0
    %278 = vmatmul.mubr.f32.gmra.mxu0 %v145
    %v279 = vpop.f32.mrf.mxu0
    %v280 = vadd.f32 0.0, %v279
    %v281 = vpop.f32.mrf.mxu0
    %282 = vmatprep.mubr.f32.mxu0 0.0
    %283 = vmatmul.mubr.f32.gmra.mxu0 %v146
    %v284 = vpop.f32.mrf.mxu0
    %v285 = vadd.f32 0.0, %v284
    %v286 = vpop.f32.mrf.mxu0
    %287 = vmatprep.mubr.f32.mxu0 0.0
    %288 = vmatmul.mubr.f32.gmra.mxu0 %v147
    %v289 = vpop.f32.mrf.mxu0
    %v290 = vadd.f32 0.0, %v289
    %v291 = vpop.f32.mrf.mxu0
    %292 = vdwg.mxu0
    %v293 = vadd.f32 %v116, %v215
    %v294 = vadd.f32 %v117, %v220
    %v295 = vadd.f32 %v118, %v225
    %v296 = vadd.f32 %v119, %v230
    %v297 = vadd.f32 %v120, %v235
    %v298 = vadd.f32 %v121, %v240
    %v299 = vadd.f32 %v122, %v245
    %v300 = vadd.f32 %v123, %v250
    %v301 = vadd.f32 %v124, %v255
    %v302 = vadd.f32 %v125, %v260
    %v303 = vadd.f32 %v126, %v265
    %v304 = vadd.f32 %v127, %v270
    %v305 = vadd.f32 %v128, %v275
    %v306 = vadd.f32 %v129, %v280
    %v307 = vadd.f32 %v130, %v285
    %v308 = vadd.f32 %v131, %v290
    %309 = vst [vmem:[#allocation2] sm:$0xff] %v293
    %310 = vst [vmem:[#allocation2 + $0x8] sm:$0xff] %v294
    %311 = vst [vmem:[#allocation2 + $0x10] sm:$0xff] %v295
    %312 = vst [vmem:[#allocation2 + $0x18] sm:$0xff] %v296
    %313 = vst [vmem:[#allocation2 + $0x20] sm:$0xff] %v297
    %314 = vst [vmem:[#allocation2 + $0x28] sm:$0xff] %v298
    %315 = vst [vmem:[#allocation2 + $0x30] sm:$0xff] %v299
    %316 = vst [vmem:[#allocation2 + $0x38] sm:$0xff] %v300
    %317 = vst [vmem:[#allocation2 + $0x40] sm:$0xff] %v301
    %318 = vst [vmem:[#allocation2 + $0x48] sm:$0xff] %v302
    %319 = vst [vmem:[#allocation2 + $0x50] sm:$0xff] %v303
    %320 = vst [vmem:[#allocation2 + $0x58] sm:$0xff] %v304
    %321 = vst [vmem:[#allocation2 + $0x60] sm:$0xff] %v305
    %322 = vst [vmem:[#allocation2 + $0x68] sm:$0xff] %v306
    %323 = vst [vmem:[#allocation2 + $0x70] sm:$0xff] %v307
    %324 = vst [vmem:[#allocation2 + $0x78] sm:$0xff] %v308
    // Predicated region
    $region38: #{tpu_custom_call.1} parent=1 // pred_check
      %p325 = pneg %p62
    $region39: #{tpu_custom_call.1} parent=1 // pred_check_branch
      %327 = sbr.rel (%p325) target = $region41
    $region40: #{tpu_custom_call.1} parent=1 // pred_region
      %v328 = vld [vmem:[%s3] sm:$0xff]
      %v329 = vld [vmem:[%s3 + $0x8] sm:$0xff]
      %v330 = vld [vmem:[%s3 + $0x10] sm:$0xff]
      %v331 = vld [vmem:[%s3 + $0x18] sm:$0xff]
      %v332 = vld [vmem:[%s3 + $0x20] sm:$0xff]
      %v333 = vld [vmem:[%s3 + $0x28] sm:$0xff]
      %v334 = vld [vmem:[%s3 + $0x30] sm:$0xff]
      %v335 = vld [vmem:[%s3 + $0x38] sm:$0xff]
      %v336 = vld [vmem:[%s3 + $0x40] sm:$0xff]
      %v337 = vld [vmem:[%s3 + $0x48] sm:$0xff]
      %v338 = vld [vmem:[%s3 + $0x50] sm:$0xff]
      %v339 = vld [vmem:[%s3 + $0x58] sm:$0xff]
      %v340 = vld [vmem:[%s3 + $0x60] sm:$0xff]
      %v341 = vld [vmem:[%s3 + $0x68] sm:$0xff]
      %v342 = vld [vmem:[%s3 + $0x70] sm:$0xff]
      %v343 = vld [vmem:[%s3 + $0x78] sm:$0xff]
      %v344 = vld [vmem:[#allocation2] sm:$0xff]
      %v345 = vld [vmem:[#allocation2 + $0x8] sm:$0xff]
      %v346 = vld [vmem:[#allocation2 + $0x10] sm:$0xff]
      %v347 = vld [vmem:[#allocation2 + $0x18] sm:$0xff]
      %v348 = vld [vmem:[#allocation2 + $0x20] sm:$0xff]
      %v349 = vld [vmem:[#allocation2 + $0x28] sm:$0xff]
      %v350 = vld [vmem:[#allocation2 + $0x30] sm:$0xff]
      %v351 = vld [vmem:[#allocation2 + $0x38] sm:$0xff]
      %v352 = vld [vmem:[#allocation2 + $0x40] sm:$0xff]
      %v353 = vld [vmem:[#allocation2 + $0x48] sm:$0xff]
      %v354 = vld [vmem:[#allocation2 + $0x50] sm:$0xff]
      %v355 = vld [vmem:[#allocation2 + $0x58] sm:$0xff]
      %v356 = vld [vmem:[#allocation2 + $0x60] sm:$0xff]
      %v357 = vld [vmem:[#allocation2 + $0x68] sm:$0xff]
      %v358 = vld [vmem:[#allocation2 + $0x70] sm:$0xff]
      %v359 = vld [vmem:[#allocation2 + $0x78] sm:$0xff]
      %361 = vset.pattern.permute.xlu0 0
      %362 = vperm.xlu0 %361, %v328
      %v363 = vpop.permute.xlu0 %362
      %366 = vset.pattern.permute.xlu0 0
      %367 = vperm.xlu0 %366, %v329
      %v368 = vpop.permute.xlu0 %367
      %371 = vset.pattern.permute.xlu0 0
      %372 = vperm.xlu0 %371, %v330
      %v373 = vpop.permute.xlu0 %372
      %376 = vset.pattern.permute.xlu0 0
      %377 = vperm.xlu0 %376, %v331
      %v378 = vpop.permute.xlu0 %377
      %381 = vset.pattern.permute.xlu0 0
      %382 = vperm.xlu0 %381, %v332
      %v383 = vpop.permute.xlu0 %382
      %386 = vset.pattern.permute.xlu0 0
      %387 = vperm.xlu0 %386, %v333
      %v388 = vpop.permute.xlu0 %387
      %391 = vset.pattern.permute.xlu0 0
      %392 = vperm.xlu0 %391, %v334
      %v393 = vpop.permute.xlu0 %392
      %396 = vset.pattern.permute.xlu0 0
      %397 = vperm.xlu0 %396, %v335
      %v398 = vpop.permute.xlu0 %397
      %401 = vset.pattern.permute.xlu0 0
      %402 = vperm.xlu0 %401, %v336
      %v403 = vpop.permute.xlu0 %402
      %406 = vset.pattern.permute.xlu0 0
      %407 = vperm.xlu0 %406, %v337
      %v408 = vpop.permute.xlu0 %407
      %411 = vset.pattern.permute.xlu0 0
      %412 = vperm.xlu0 %411, %v338
      %v413 = vpop.permute.xlu0 %412
      %416 = vset.pattern.permute.xlu0 0
      %417 = vperm.xlu0 %416, %v339
      %v418 = vpop.permute.xlu0 %417
      %421 = vset.pattern.permute.xlu0 0
      %422 = vperm.xlu0 %421, %v340
      %v423 = vpop.permute.xlu0 %422
      %426 = vset.pattern.permute.xlu0 0
      %427 = vperm.xlu0 %426, %v341
      %v428 = vpop.permute.xlu0 %427
      %431 = vset.pattern.permute.xlu0 0
      %432 = vperm.xlu0 %431, %v342
      %v433 = vpop.permute.xlu0 %432
      %436 = vset.pattern.permute.xlu0 0
      %437 = vperm.xlu0 %436, %v343
      %v438 = vpop.permute.xlu0 %437
      %v440 = vmul.f32 %v363, %v344
      %v441 = vmul.f32 %v368, %v345
      %v442 = vmul.f32 %v373, %v346
      %v443 = vmul.f32 %v378, %v347
      %v444 = vmul.f32 %v383, %v348
      %v445 = vmul.f32 %v388, %v349
      %v446 = vmul.f32 %v393, %v350
      %v447 = vmul.f32 %v398, %v351
      %v448 = vmul.f32 %v403, %v352
      %v449 = vmul.f32 %v408, %v353
      %v450 = vmul.f32 %v413, %v354
      %v451 = vmul.f32 %v418, %v355
      %v452 = vmul.f32 %v423, %v356
      %v453 = vmul.f32 %v428, %v357
      %v454 = vmul.f32 %v433, %v358
      %v455 = vmul.f32 %v438, %v359
      %v456 = vld [vmem:[#allocation6] sm:$0xff]
      %v457 = vld [vmem:[#allocation6 + $0x8] sm:$0xff]
      %v458 = vld [vmem:[#allocation6 + $0x10] sm:$0xff]
      %v459 = vld [vmem:[#allocation6 + $0x18] sm:$0xff]
      %v460 = vld [vmem:[#allocation6 + $0x20] sm:$0xff]
      %v461 = vld [vmem:[#allocation6 + $0x28] sm:$0xff]
      %v462 = vld [vmem:[#allocation6 + $0x30] sm:$0xff]
      %v463 = vld [vmem:[#allocation6 + $0x38] sm:$0xff]
      %v464 = vld [vmem:[#allocation6 + $0x40] sm:$0xff]
      %v465 = vld [vmem:[#allocation6 + $0x48] sm:$0xff]
      %v466 = vld [vmem:[#allocation6 + $0x50] sm:$0xff]
      %v467 = vld [vmem:[#allocation6 + $0x58] sm:$0xff]
      %v468 = vld [vmem:[#allocation6 + $0x60] sm:$0xff]
      %v469 = vld [vmem:[#allocation6 + $0x68] sm:$0xff]
      %v470 = vld [vmem:[#allocation6 + $0x70] sm:$0xff]
      %v471 = vld [vmem:[#allocation6 + $0x78] sm:$0xff]
      %v472 = vadd.f32 %v440, %v456
      %v473 = vadd.f32 %v441, %v457
      %v474 = vadd.f32 %v442, %v458
      %v475 = vadd.f32 %v443, %v459
      %v476 = vadd.f32 %v444, %v460
      %v477 = vadd.f32 %v445, %v461
      %v478 = vadd.f32 %v446, %v462
      %v479 = vadd.f32 %v447, %v463
      %v480 = vadd.f32 %v448, %v464
      %v481 = vadd.f32 %v449, %v465
      %v482 = vadd.f32 %v450, %v466
      %v483 = vadd.f32 %v451, %v467
      %v484 = vadd.f32 %v452, %v468
      %v485 = vadd.f32 %v453, %v469
      %v486 = vadd.f32 %v454, %v470
      %v487 = vadd.f32 %v455, %v471
      %v488 = vld [vmem:[#allocation8] sm:$0xff]
      %v489 = vld [vmem:[#allocation8 + $0x8] sm:$0xff]
      %v490 = vld [vmem:[#allocation8 + $0x10] sm:$0xff]
      %v491 = vld [vmem:[#allocation8 + $0x18] sm:$0xff]
      %v492 = vld [vmem:[#allocation8 + $0x20] sm:$0xff]
      %v493 = vld [vmem:[#allocation8 + $0x28] sm:$0xff]
      %v494 = vld [vmem:[#allocation8 + $0x30] sm:$0xff]
      %v495 = vld [vmem:[#allocation8 + $0x38] sm:$0xff]
      %v496 = vld [vmem:[#allocation8 + $0x40] sm:$0xff]
      %v497 = vld [vmem:[#allocation8 + $0x48] sm:$0xff]
      %v498 = vld [vmem:[#allocation8 + $0x50] sm:$0xff]
      %v499 = vld [vmem:[#allocation8 + $0x58] sm:$0xff]
      %v500 = vld [vmem:[#allocation8 + $0x60] sm:$0xff]
      %v501 = vld [vmem:[#allocation8 + $0x68] sm:$0xff]
      %v502 = vld [vmem:[#allocation8 + $0x70] sm:$0xff]
      %v503 = vld [vmem:[#allocation8 + $0x78] sm:$0xff]
      %v504 = vmul.f32 %v472, 0.5945349
      %v505 = vmul.f32 %v473, 0.5945349
      %v506 = vmul.f32 %v474, 0.5945349
      %v507 = vmul.f32 %v475, 0.5945349
      %v508 = vmul.f32 %v476, 0.5945349
      %v509 = vmul.f32 %v477, 0.5945349
      %v510 = vmul.f32 %v478, 0.5945349
      %v511 = vmul.f32 %v479, 0.5945349
      %v512 = vmul.f32 %v480, 0.5945349
      %v513 = vmul.f32 %v481, 0.5945349
      %v514 = vmul.f32 %v482, 0.5945349
      %v515 = vmul.f32 %v483, 0.5945349
      %v516 = vmul.f32 %v484, 0.5945349
      %v517 = vmul.f32 %v485, 0.5945349
      %v518 = vmul.f32 %v486, 0.5945349
      %v519 = vmul.f32 %v487, 0.5945349
      %520 = vmatprep.subr.mxu0 0.0
      %521 = vmatpush1.msra.mxu0 %v503
      %522 = vmatprep.subr.mxu0 0.0
      %523 = vmatpush1.msra.mxu0 %v502
      %524 = vmatprep.subr.mxu0 0.0
      %525 = vmatpush1.msra.mxu0 %v501
      %526 = vmatprep.subr.mxu0 0.0
      %527 = vmatpush1.msra.mxu0 %v500
      %528 = vmatprep.subr.mxu0 0.0
      %529 = vmatpush1.msra.mxu0 %v499
      %530 = vmatprep.subr.mxu0 0.0
      %531 = vmatpush1.msra.mxu0 %v498
      %532 = vmatprep.subr.mxu0 0.0
      %533 = vmatpush1.msra.mxu0 %v497
      %534 = vmatprep.subr.mxu0 0.0
      %535 = vmatpush1.msra.mxu0 %v496
      %536 = vmatprep.subr.mxu0 0.0
      %537 = vmatpush1.msra.mxu0 %v495
      %538 = vmatprep.subr.mxu0 0.0
      %539 = vmatpush1.msra.mxu0 %v494
      %540 = vmatprep.subr.mxu0 0.0
      %541 = vmatpush1.msra.mxu0 %v493
      %542 = vmatprep.subr.mxu0 0.0
      %543 = vmatpush1.msra.mxu0 %v492
      %544 = vmatprep.subr.mxu0 0.0
      %545 = vmatpush1.msra.mxu0 %v491
      %546 = vmatprep.subr.mxu0 0.0
      %547 = vmatpush1.msra.mxu0 %v490
      %548 = vmatprep.subr.mxu0 0.0
      %549 = vmatpush1.msra.mxu0 %v489
      %550 = vmatprep.subr.mxu0 0.0
      %551 = vmatpush1.msra.mxu0 %v488
      %552 = vmatprep.subr.mxu0 0.0
      %553 = vmatpush2.msra.mxu0 0.0
      %554 = vmatprep.subr.mxu0 0.0
      %555 = vmatpush2.msra.mxu0 0.0
      %556 = vmatprep.subr.mxu0 0.0
      %557 = vmatpush2.msra.mxu0 0.0
      %558 = vmatprep.subr.mxu0 0.0
      %559 = vmatpush2.msra.mxu0 0.0
      %560 = vmatprep.subr.mxu0 0.0
      %561 = vmatpush2.msra.mxu0 0.0
      %562 = vmatprep.subr.mxu0 0.0
      %563 = vmatpush2.msra.mxu0 0.0
      %564 = vmatprep.subr.mxu0 0.0
      %565 = vmatpush2.msra.mxu0 0.0
      %566 = vmatprep.subr.mxu0 0.0
      %567 = vmatpush2.msra.mxu0 0.0
      %568 = vmatprep.subr.mxu0 0.0
      %569 = vmatpush2.msra.mxu0 0.0
      %570 = vmatprep.subr.mxu0 0.0
      %571 = vmatpush2.msra.mxu0 0.0
      %572 = vmatprep.subr.mxu0 0.0
      %573 = vmatpush2.msra.mxu0 0.0
      %574 = vmatprep.subr.mxu0 0.0
      %575 = vmatpush2.msra.mxu0 0.0
      %576 = vmatprep.subr.mxu0 0.0
      %577 = vmatpush2.msra.mxu0 0.0
      %578 = vmatprep.subr.mxu0 0.0
      %579 = vmatpush2.msra.mxu0 0.0
      %580 = vmatprep.subr.mxu0 0.0
      %581 = vmatpush2.msra.mxu0 0.0
      %582 = vmatprep.subr.mxu0 0.0
      %583 = vmatpush2.msra.mxu0 0.0
      %584 = vmatprep.mubr.f32.mxu0 0.0
      %585 = vmatmul.mubr.f32.gmra.mxu0 %v472
      %v586 = vpop.f32.mrf.mxu0
      %v587 = vadd.f32 %v504, %v586
      %v588 = vpop.f32.mrf.mxu0
      %589 = vmatprep.mubr.f32.mxu0 0.0
      %590 = vmatmul.mubr.f32.gmra.mxu0 %v473
      %v591 = vpop.f32.mrf.mxu0
      %v592 = vadd.f32 %v505, %v591
      %v593 = vpop.f32.mrf.mxu0
      %594 = vmatprep.mubr.f32.mxu0 0.0
      %595 = vmatmul.mubr.f32.gmra.mxu0 %v474
      %v596 = vpop.f32.mrf.mxu0
      %v597 = vadd.f32 %v506, %v596
      %v598 = vpop.f32.mrf.mxu0
      %599 = vmatprep.mubr.f32.mxu0 0.0
      %600 = vmatmul.mubr.f32.gmra.mxu0 %v475
      %v601 = vpop.f32.mrf.mxu0
      %v602 = vadd.f32 %v507, %v601
      %v603 = vpop.f32.mrf.mxu0
      %604 = vmatprep.mubr.f32.mxu0 0.0
      %605 = vmatmul.mubr.f32.gmra.mxu0 %v476
      %v606 = vpop.f32.mrf.mxu0
      %v607 = vadd.f32 %v508, %v606
      %v608 = vpop.f32.mrf.mxu0
      %609 = vmatprep.mubr.f32.mxu0 0.0
      %610 = vmatmul.mubr.f32.gmra.mxu0 %v477
      %v611 = vpop.f32.mrf.mxu0
      %v612 = vadd.f32 %v509, %v611
      %v613 = vpop.f32.mrf.mxu0
      %614 = vmatprep.mubr.f32.mxu0 0.0
      %615 = vmatmul.mubr.f32.gmra.mxu0 %v478
      %v616 = vpop.f32.mrf.mxu0
      %v617 = vadd.f32 %v510, %v616
      %v618 = vpop.f32.mrf.mxu0
      %619 = vmatprep.mubr.f32.mxu0 0.0
      %620 = vmatmul.mubr.f32.gmra.mxu0 %v479
      %v621 = vpop.f32.mrf.mxu0
      %v622 = vadd.f32 %v511, %v621
      %v623 = vpop.f32.mrf.mxu0
      %624 = vmatprep.mubr.f32.mxu0 0.0
      %625 = vmatmul.mubr.f32.gmra.mxu0 %v480
      %v626 = vpop.f32.mrf.mxu0
      %v627 = vadd.f32 %v512, %v626
      %v628 = vpop.f32.mrf.mxu0
      %629 = vmatprep.mubr.f32.mxu0 0.0
      %630 = vmatmul.mubr.f32.gmra.mxu0 %v481
      %v631 = vpop.f32.mrf.mxu0
      %v632 = vadd.f32 %v513, %v631
      %v633 = vpop.f32.mrf.mxu0
      %634 = vmatprep.mubr.f32.mxu0 0.0
      %635 = vmatmul.mubr.f32.gmra.mxu0 %v482
      %v636 = vpop.f32.mrf.mxu0
      %v637 = vadd.f32 %v514, %v636
      %v638 = vpop.f32.mrf.mxu0
      %639 = vmatprep.mubr.f32.mxu0 0.0
      %640 = vmatmul.mubr.f32.gmra.mxu0 %v483
      %v641 = vpop.f32.mrf.mxu0
      %v642 = vadd.f32 %v515, %v641
      %v643 = vpop.f32.mrf.mxu0
      %644 = vmatprep.mubr.f32.mxu0 0.0
      %645 = vmatmul.mubr.f32.gmra.mxu0 %v484
      %v646 = vpop.f32.mrf.mxu0
      %v647 = vadd.f32 %v516, %v646
      %v648 = vpop.f32.mrf.mxu0
      %649 = vmatprep.mubr.f32.mxu0 0.0
      %650 = vmatmul.mubr.f32.gmra.mxu0 %v485
      %v651 = vpop.f32.mrf.mxu0
      %v652 = vadd.f32 %v517, %v651
      %v653 = vpop.f32.mrf.mxu0
      %654 = vmatprep.mubr.f32.mxu0 0.0
      %655 = vmatmul.mubr.f32.gmra.mxu0 %v486
      %v656 = vpop.f32.mrf.mxu0
      %v657 = vadd.f32 %v518, %v656
      %v658 = vpop.f32.mrf.mxu0
      %659 = vmatprep.mubr.f32.mxu0 0.0
      %660 = vmatmul.mubr.f32.gmra.mxu0 %v487
      %v661 = vpop.f32.mrf.mxu0
      %v662 = vadd.f32 %v519, %v661
      %v663 = vpop.f32.mrf.mxu0
      %664 = vdwg.mxu0
      %665 = vst [vmem:[#allocation9] sm:$0xff] %v587
      %666 = vst [vmem:[#allocation9 + $0x8] sm:$0xff] %v592
      %667 = vst [vmem:[#allocation9 + $0x10] sm:$0xff] %v597
      %668 = vst [vmem:[#allocation9 + $0x18] sm:$0xff] %v602
      %669 = vst [vmem:[#allocation9 + $0x20] sm:$0xff] %v607
      %670 = vst [vmem:[#allocation9 + $0x28] sm:$0xff] %v612
      %671 = vst [vmem:[#allocation9 + $0x30] sm:$0xff] %v617
      %672 = vst [vmem:[#allocation9 + $0x38] sm:$0xff] %v622
      %673 = vst [vmem:[#allocation9 + $0x40] sm:$0xff] %v627
      %674 = vst [vmem:[#allocation9 + $0x48] sm:$0xff] %v632
      %675 = vst [vmem:[#allocation9 + $0x50] sm:$0xff] %v637
      %676 = vst [vmem:[#allocation9 + $0x58] sm:$0xff] %v642
      %677 = vst [vmem:[#allocation9 + $0x60] sm:$0xff] %v647
      %678 = vst [vmem:[#allocation9 + $0x68] sm:$0xff] %v652
      %679 = vst [vmem:[#allocation9 + $0x70] sm:$0xff] %v657
      %680 = vst [vmem:[#allocation9 + $0x78] sm:$0xff] %v662
    $region41: #{tpu_custom_call.1} parent=1 // pred_fallthru
      _
    // Predicated region
    $region42: #{tpu_custom_call.1} parent=1 // pred_check
      _
    $region43: #{tpu_custom_call.1} parent=1 // pred_check_branch
      %682 = sbr.rel (0) target = $region45
    $region44: #{tpu_custom_call.1} parent=1 // pred_region
      %s684 = ssub.s32 2048, 2048
      %685 = vsyncadd [#allocation5], %s684
      %s686 = sshll.u32 [#allocation9], 4
      %s687 = int_to_ptr.vmem [resolvable:$true] %s686
      %692 = dma.vmem_to_hbm [thread:$0]  %s687, 2048, %s5, [#allocation5], 128, 128, 8
    $region45: #{tpu_custom_call.1} parent=1 // pred_fallthru
      _
    // Predicated region
    $region46: #{tpu_custom_call.1} parent=1 // pred_check
      _
    $region47: #{tpu_custom_call.1} parent=1 // pred_check_branch
      %694 = sbr.rel (0) target = $region49
    $region48: #{tpu_custom_call.1} parent=1 // pred_region
      %695 = dma.done [#allocation5], 2048
    $region49: #{tpu_custom_call.1} parent=1 // pred_fallthru
      _
    %696 = vsyncpa [#allocation4], 1
    %697 = vsyncpa [#allocation7], 1
    %698 = vsyncpa [#allocation5], 1

</llo_original>
